<compile_context>
chip_gen: v6e
topology: v6e:2x2x1
jax: 0.10.0
libtpu: 0.0.40
codegen_flags: <defaults>
</compile_context>

<pallas_src>
import numpy as np
import jax
import jax.numpy as jnp
from jax.experimental import pallas as pl
from jax.experimental.pallas import tpu as pltpu

LANE = 128


def _round_up(x, m):
    return ((x + m - 1) // m) * m


def _vmem_capacity_bytes():
    try:
        return int(pltpu.get_tpu_info().vmem_capacity_bytes)
    except Exception:
        return 128 * 1024 * 1024


VMEM_CAP = _vmem_capacity_bytes()
# Leave headroom for compiler-internal scratch: ~54 MiB on v7x, ~108 MiB on v5e/v6e.
VMEM_LIMIT_BYTES = int(VMEM_CAP * 0.85)


def choose_tiles(n_max):
    """(N_pad, row_tile TM, contraction_tile TK) for the dense propagation matmuls."""
    n_pad = _round_up(max(n_max, 256), 256)       # lane-dense contraction / lane dims
    if n_pad <= 2048:
        return n_pad, n_pad, n_pad                # whole (small) graph per block
    tm = 2048
    # v5e/v6e (128 MiB VMEM): 2048x2048 bf16 A blocks; v7x (64 MiB): 2048x1024 so the
    # fused two-branch (2, tm, tk) A block of K3 stays comfortably inside VMEM.
    tk = 2048 if VMEM_CAP >= 96 * 1024 * 1024 else 1024
    return _round_up(n_max, tm), tm, tk


def pad_feature_dim(f):
    fp = _round_up(f, LANE)
    return fp if fp <= 2048 else _round_up(f, 2048)


def choose_head_tile(m_pad):
    if m_pad <= 4096:
        return m_pad
    for cand in (4096, 2048, 1024, 512, 256):
        if m_pad % cand == 0:
            return cand
    return 256


# ----------------------------------------------------------------------------
# Pallas kernels
# ----------------------------------------------------------------------------
def transform1_kernel(x_ref, w1_ref, out_ref, acc_ref):
    """xw1 = x @ W1 (shared between the GCN and PPMI branches), K-tiled over F."""
    @pl.when(pl.program_id(2) == 0)
    def _init():
        acc_ref[...] = jnp.zeros_like(acc_ref)

    acc_ref[...] += jnp.dot(x_ref[...], w1_ref[...],
                            preferred_element_type=jnp.float32)

    @pl.when(pl.program_id(2) == pl.num_programs(2) - 1)
    def _finalize():
        out_ref[...] = acc_ref[...].astype(out_ref.dtype)


def prop1_kernel(klist_ref, kcnt_ref, a_ref, xw1_ref, w2_ref, b1_ref,
                 out_ref, acc_ref):
    """h1w2 = relu(A @ xw1 + b1) @ W2 for one (graph, branch, row-tile).

    The k grid axis walks only the nonzero column tiles of this A row-tile
    (compact list in SMEM via scalar prefetch); padded steps are no-ops.
    """
    g, b = pl.program_id(0), pl.program_id(1)
    i, k = pl.program_id(2), pl.program_id(3)
    n_i = pl.num_programs(2)
    flat = (g * 2 + b) * n_i + i

    @pl.when(k == 0)
    def _init():
        acc_ref[...] = jnp.zeros_like(acc_ref)

    @pl.when(k < kcnt_ref[flat])
    def _accumulate():
        acc_ref[...] += jnp.dot(a_ref[...], xw1_ref[...],
                                preferred_element_type=jnp.float32)

    @pl.when(k == pl.num_programs(3) - 1)
    def _finalize():
        h1 = jnp.maximum(acc_ref[...] + b1_ref[...], 0.0)
        # TODO(synk): F.dropout omitted (inference semantics; identity at eval time).
        out_ref[...] = jnp.dot(h1.astype(jnp.bfloat16), w2_ref[...],
                               preferred_element_type=jnp.float32
                               ).astype(out_ref.dtype)


def prop2_attn_kernel(klist_ref, kcnt_ref, a_ref, h_ref, b2_ref, aw_ref, ab_ref,
                      out_ref, accg_ref, accp_ref):
    """emb = attention blend of (A_gcn @ h1w2_gcn + b2, A_ppmi @ h1w2_ppmi + b2)."""
    g, i, k = pl.program_id(0), pl.program_id(1), pl.program_id(2)
    n_i = pl.num_programs(1)
    flat = g * n_i + i

    @pl.when(k == 0)
    def _init():
        accg_ref[...] = jnp.zeros_like(accg_ref)
        accp_ref[...] = jnp.zeros_like(accp_ref)

    @pl.when(k < kcnt_ref[flat])
    def _accumulate():
        accg_ref[...] += jnp.dot(a_ref[0], h_ref[0],
                                 preferred_element_type=jnp.float32)
        accp_ref[...] += jnp.dot(a_ref[1], h_ref[1],
                                 preferred_element_type=jnp.float32)

    @pl.when(k == pl.num_programs(2) - 1)
    def _finalize():
        b2 = b2_ref[...]
        h_gcn = accg_ref[...] + b2            # (TM, E_pad) f32
        h_ppmi = accp_ref[...] + b2
        aw = aw_ref[...]                      # (1, E_pad)  (zero in padded lanes)
        ab = ab_ref[...]                      # (1, 1)
        # VPU broadcast-multiply + lane reduce instead of a width-1 MXU matmul.
        s_g = jnp.sum(h_gcn * aw, axis=-1, keepdims=True) + ab
        s_p = jnp.sum(h_ppmi * aw, axis=-1, keepdims=True) + ab
        m = jnp.maximum(s_g, s_p)
        e_g = jnp.exp(s_g - m)
        e_p = jnp.exp(s_p - m)
        inv = pl.reciprocal(e_g + e_p, approx=True)
        out_ref[...] = (h_gcn * (e_g * inv)
                        + h_ppmi * (e_p * inv)).astype(out_ref.dtype)


def heads_kernel(emb_ref, w1h_ref, b1h_ref, w2h_ref, b2h_ref, cmask_ref, out_ref):
    """Fused node_classifier + domain_discriminator, lane-dense (TM, 128) output.

    Output columns: [0:C] = classifier logits, [C:C+2] = domain logits, rest = 0.
    GRL is identity in the forward pass.  bf16 MXU operands, f32 accumulation.
    """
    z = jnp.dot(emb_ref[...], w1h_ref[...],
                preferred_element_type=jnp.float32) + b1h_ref[...]
    zr = jnp.maximum(z, 0.0)
    # TODO(synk): nn.Dropout omitted (inference semantics; identity at eval time).
    dom = jnp.dot(zr.astype(jnp.bfloat16), w2h_ref[...],
                  preferred_element_type=jnp.float32) + b2h_ref[...]
    out_ref[...] = z * cmask_ref[...] + dom


# ----------------------------------------------------------------------------
# pallas_call wrappers
# ----------------------------------------------------------------------------
def encoder_forward(x_all, a_all, kl2, kc2, kmax2, kl3, kc3, kmax3,
                    w1, b1, w2, b2, aw, ab, *, tm, tk):
    g_count, n_pad, f_pad = x_all.shape
    h_dim = w1.shape[1]
    e_dim = w2.shape[1]
    n_i = n_pad // tm
    tkf = min(f_pad, 2048)
    n_kf = f_pad // tkf

    # K1: shared transform xw1 = x @ W1 (F-tiled; accumulator over feature chunks).
    # TODO(synk): when F_pad <= H this could be fused into K2 to drop the xw1 round trip.
    xw1 = pl.pallas_call(
        transform1_kernel,
        out_shape=jax.ShapeDtypeStruct((g_count, n_pad, h_dim), jnp.bfloat16),
        grid_spec=pltpu.PrefetchScalarGridSpec(
            num_scalar_prefetch=0, grid=(g_count, n_i, n_kf),
            in_specs=[pl.BlockSpec((None, tm, tkf), lambda g, i, k: (g, i, k)),
                      pl.BlockSpec((tkf, h_dim), lambda g, i, k: (k, 0))],
            out_specs=pl.BlockSpec((None, tm, h_dim), lambda g, i, k: (g, i, 0)),
            scratch_shapes=[pltpu.VMEM((tm, h_dim), jnp.float32)]),
        compiler_params=pltpu.CompilerParams(
            dimension_semantics=("parallel", "parallel", "arbitrary"),
            vmem_limit_bytes=VMEM_LIMIT_BYTES),
    )(x_all, w1)

    # K2: layer-1 propagate (+bias, relu) fused with layer-2 transform.
    # Sparse tile-skipping: k walks the compact nonzero-tile list for (g, b, i).
    def a2_map(g, b, i, k, kl, kc):
        return (g, b, i, kl[((g * 2 + b) * n_i + i) * kmax2 + k])

    def x2_map(g, b, i, k, kl, kc):
        return (g, kl[((g * 2 + b) * n_i + i) * kmax2 + k], 0)

    h1w2 = pl.pallas_call(
        prop1_kernel,
        out_shape=jax.ShapeDtypeStruct((g_count, 2, n_pad, e_dim), jnp.bfloat16),
        grid_spec=pltpu.PrefetchScalarGridSpec(
            num_scalar_prefetch=2, grid=(g_count, 2, n_i, kmax2),
            in_specs=[
                pl.BlockSpec((None, None, tm, tk), a2_map),
                pl.BlockSpec((None, tk, h_dim), x2_map),
                pl.BlockSpec((h_dim, e_dim), lambda g, b, i, k, kl, kc: (0, 0)),
                pl.BlockSpec((1, h_dim), lambda g, b, i, k, kl, kc: (0, 0)),
            ],
            out_specs=pl.BlockSpec((None, None, tm, e_dim),
                                   lambda g, b, i, k, kl, kc: (g, b, i, 0)),
            scratch_shapes=[pltpu.VMEM((tm, h_dim), jnp.float32)]),
        compiler_params=pltpu.CompilerParams(
            dimension_semantics=("parallel", "parallel", "parallel", "arbitrary"),
            vmem_limit_bytes=VMEM_LIMIT_BYTES),
    )(kl2, kc2, a_all, xw1, w2, b1)

    # K3: layer-2 propagate (+bias) for both branches + attention fusion.
    # Sparse tile-skipping over the union of nonzero tiles of both branches.
    # TODO(synk): on v7x an fp8(e4m3) A stream would halve the dominant HBM traffic
    # further, but normalized edge weights lose mantissa; not enabled.
    def a3_map(g, i, k, kl, kc):
        return (g, 0, i, kl[(g * n_i + i) * kmax3 + k])

    def h3_map(g, i, k, kl, kc):
        return (g, 0, kl[(g * n_i + i) * kmax3 + k], 0)

    emb = pl.pallas_call(
        prop2_attn_kernel,
        out_shape=jax.ShapeDtypeStruct((g_count, n_pad, e_dim), jnp.bfloat16),
        grid_spec=pltpu.PrefetchScalarGridSpec(
            num_scalar_prefetch=2, grid=(g_count, n_i, kmax3),
            in_specs=[
                pl.BlockSpec((None, 2, tm, tk), a3_map),
                pl.BlockSpec((None, 2, tk, e_dim), h3_map),
                pl.BlockSpec((1, e_dim), lambda g, i, k, kl, kc: (0, 0)),
                pl.BlockSpec((1, e_dim), lambda g, i, k, kl, kc: (0, 0)),
                pl.BlockSpec((1, 1), lambda g, i, k, kl, kc: (0, 0)),
            ],
            out_specs=pl.BlockSpec((None, tm, e_dim),
                                   lambda g, i, k, kl, kc: (g, i, 0)),
            scratch_shapes=[pltpu.VMEM((tm, e_dim), jnp.float32),
                            pltpu.VMEM((tm, e_dim), jnp.float32)]),
        compiler_params=pltpu.CompilerParams(
            dimension_semantics=("parallel", "parallel", "arbitrary"),
            vmem_limit_bytes=VMEM_LIMIT_BYTES),
    )(kl3, kc3, a_all, h1w2, b2, aw, ab)

    return emb


def heads_forward(emb, w1h, b1h, w2h, b2h, cmask, *, tmh):
    m_pad, e_dim = emb.shape
    hw = w1h.shape[1]
    return pl.pallas_call(
        heads_kernel,
        out_shape=jax.ShapeDtypeStruct((m_pad, hw), jnp.float32),
        grid_spec=pltpu.PrefetchScalarGridSpec(
            num_scalar_prefetch=0, grid=(m_pad // tmh,),
            in_specs=[pl.BlockSpec((tmh, e_dim), lambda i: (i, 0)),
                      pl.BlockSpec((e_dim, hw), lambda i: (0, 0)),
                      pl.BlockSpec((1, hw), lambda i: (0, 0)),
                      pl.BlockSpec((hw, hw), lambda i: (0, 0)),
                      pl.BlockSpec((1, hw), lambda i: (0, 0)),
                      pl.BlockSpec((1, hw), lambda i: (0, 0))],
            out_specs=pl.BlockSpec((tmh, hw), lambda i: (i, 0))),
        compiler_params=pltpu.CompilerParams(
            dimension_semantics=("parallel",),
            vmem_limit_bytes=VMEM_LIMIT_BYTES),
    )(emb, w1h, b1h, w2h, b2h, cmask)


# ----------------------------------------------------------------------------
# Host-side graph preprocessing (equivalent of the cached `norm(...)` calls)
# ----------------------------------------------------------------------------
def gcn_norm_dense(edge_index, num_nodes):
    """Dense GCN propagation matrix: add self loops + symmetric normalization."""
    W = np.zeros((num_nodes, num_nodes), dtype=np.float64)
    np.add.at(W, (edge_index[0].astype(np.int64), edge_index[1].astype(np.int64)), 1.0)
    diag = np.arange(num_nodes)
    W[diag, diag] = np.where(W[diag, diag] == 0.0, 1.0, W[diag, diag])
    deg = W.sum(axis=1)
    dinv = np.where(deg > 0, deg ** -0.5, 0.0)
    M = (dinv[:, None] * W * dinv[None, :]).T          # M[col, row] = norm(row->col)
    return M.astype(np.float32)


def ppmi_norm_dense(edge_index, num_nodes, path_len):
    """Dense PPMI propagation matrix.

    TODO(synk): the reference PPMIConvolution.norm uses np.random random walks
    (non-deterministic host preprocessing).  Here the walk statistics are replaced
    by their deterministic expectation (powers of the row-normalized transition
    matrix) and PPMI values are clipped at 0 to keep weighted degrees non-negative.
    """
    A = np.zeros((num_nodes, num_nodes), dtype=np.float64)
    for e in range(edge_index.shape[1]):
        a, b = int(edge_index[0, e]), int(edge_index[1, e])
        if a != b:
            A[a, b] = 1.0
            A[b, a] = 1.0
    deg = A.sum(axis=1, keepdims=True)
    T = np.divide(A, deg, out=np.zeros_like(A), where=deg > 0)

    walk = np.zeros_like(T)
    Tp = np.eye(num_nodes)
    for _ in range(path_len):
        Tp = Tp @ T
        walk += Tp
    walk /= float(path_len)

    prob_sums = walk.sum(axis=0)
    nnz = max(int((prob_sums > 0).sum()), 1)
    mask = (walk > 0) & (prob_sums[None, :] > 0)
    ratio = np.divide(walk, np.maximum(prob_sums[None, :], 1e-30),
                      out=np.ones_like(walk), where=mask)
    vals = np.log(ratio * nnz / float(path_len))
    ppmi = np.where(mask, np.maximum(vals, 0.0), 0.0)

    W = ppmi.copy()
    diag = np.arange(num_nodes)
    W[diag, diag] = np.where(W[diag, diag] == 0.0, 1.0, W[diag, diag])
    deg_w = W.sum(axis=1)
    dinv = np.where(deg_w > 0, deg_w ** -0.5, 0.0)
    M = (dinv[:, None] * W * dinv[None, :]).T
    return M.astype(np.float32)


def build_tile_lists(a_all_np, tm, tk):
    """Compact nonzero-column-tile lists (scalar-prefetch tables) for K2 and K3."""
    G, B, n_pad, _ = a_all_np.shape
    n_i, n_k = n_pad // tm, n_pad // tk
    blk = (np.abs(a_all_np).reshape(G, B, n_i, tm, n_k, tk) > 0).any(axis=(3, 5))

    counts2 = blk.sum(axis=-1).astype(np.int32)               # (G, B, n_i)
    kmax2 = max(int(counts2.max()), 1)
    klist2 = np.zeros((G, B, n_i, kmax2), np.int32)
    for g in range(G):
        for b in range(B):
            for i in range(n_i):
                idx = np.nonzero(blk[g, b, i])[0].astype(np.int32)
                c = idx.size
                if c > 0:
                    klist2[g, b, i, :c] = idx
                    klist2[g, b, i, c:] = idx[-1]   # repeat last -> no extra DMA

    blk3 = blk.any(axis=1)                                     # (G, n_i, n_k)
    counts3 = blk3.sum(axis=-1).astype(np.int32)
    kmax3 = max(int(counts3.max()), 1)
    klist3 = np.zeros((G, n_i, kmax3), np.int32)
    for g in range(G):
        for i in range(n_i):
            idx = np.nonzero(blk3[g, i])[0].astype(np.int32)
            c = idx.size
            if c > 0:
                klist3[g, i, :c] = idx
                klist3[g, i, c:] = idx[-1]

    return (jnp.asarray(klist2.reshape(-1), dtype=jnp.int32),
            jnp.asarray(counts2.reshape(-1), dtype=jnp.int32), kmax2,
            jnp.asarray(klist3.reshape(-1), dtype=jnp.int32),
            jnp.asarray(counts3.reshape(-1), dtype=jnp.int32), kmax3)


# ----------------------------------------------------------------------------
# Parameter / input packing (padding to lane-dense shapes)
# ----------------------------------------------------------------------------
def prepare_kernel_params(p, f_pad, hid_dim, emb_dim, disc_dim, num_class):
    H = _round_up(hid_dim, LANE)
    E = _round_up(emb_dim, LANE)
    HW = _round_up(num_class + 2 + disc_dim, LANE)
    C, D = num_class, disc_dim

    def pad2(a, shape):
        a = np.asarray(a, np.float32)
        out = np.zeros(shape, np.float32)
        out[:a.shape[0], :a.shape[1]] = a
        return out

    w1 = pad2(p["w1"], (f_pad, H))
    b1 = pad2(p["b1"], (1, H))
    w2 = pad2(p["w2"], (H, E))
    b2 = pad2(p["b2"], (1, E))
    aw = pad2(np.asarray(p["attn_w"], np.float32).T, (1, E))    # (emb,1) -> (1,E)
    ab = np.asarray(p["attn_b"], np.float32).reshape(1, 1)

    # Fused heads: cols [0:C] classifier, [C:C+2] domain logits, [C+2:C+2+D] hidden.
    w1h = np.zeros((E, HW), np.float32)
    w1h[:emb_dim, :C] = np.asarray(p["wc"], np.float32)
    w1h[:emb_dim, C + 2:C + 2 + D] = np.asarray(p["wd1"], np.float32)
    b1h = np.zeros((1, HW), np.float32)
    b1h[0, :C] = np.asarray(p["bc"], np.float32).reshape(-1)
    b1h[0, C + 2:C + 2 + D] = np.asarray(p["bd1"], np.float32).reshape(-1)
    w2h = np.zeros((HW, HW), np.float32)
    w2h[C + 2:C + 2 + D, C:C + 2] = np.asarray(p["wd2"], np.float32)
    b2h = np.zeros((1, HW), np.float32)
    b2h[0, C:C + 2] = np.asarray(p["bd2"], np.float32).reshape(-1)
    cmask = np.zeros((1, HW), np.float32)
    cmask[0, :C] = 1.0

    return dict(
        w1=jnp.asarray(w1, dtype=jnp.bfloat16), b1=jnp.asarray(b1),
        w2=jnp.asarray(w2, dtype=jnp.bfloat16), b2=jnp.asarray(b2),
        aw=jnp.asarray(aw), ab=jnp.asarray(ab),
        w1h=jnp.asarray(w1h, dtype=jnp.bfloat16), b1h=jnp.asarray(b1h),
        w2h=jnp.asarray(w2h, dtype=jnp.bfloat16), b2h=jnp.asarray(b2h),
        cmask=jnp.asarray(cmask),
        num_class=C,
    )


def pack_graphs(x_src, a_gcn_src, a_ppmi_src, x_tgt, a_gcn_tgt, a_ppmi_tgt):
    n_src, f_in = x_src.shape
    n_tgt = x_tgt.shape[0]
    f_pad = pad_feature_dim(f_in)
    n_pad, tm, tk = choose_tiles(max(n_src, n_tgt))
    x_all = np.zeros((2, n_pad, f_pad), np.float32)
    x_all[0, :n_src, :f_in] = np.asarray(x_src, np.float32)
    x_all[1, :n_tgt, :f_in] = np.asarray(x_tgt, np.float32)
    a_all = np.zeros((2, 2, n_pad, n_pad), np.float32)
    a_all[0, 0, :n_src, :n_src] = a_gcn_src
    a_all[0, 1, :n_src, :n_src] = a_ppmi_src
    a_all[1, 0, :n_tgt, :n_tgt] = a_gcn_tgt
    a_all[1, 1, :n_tgt, :n_tgt] = a_ppmi_tgt
    tiles = build_tile_lists(a_all, tm, tk)
    return (jnp.asarray(x_all, dtype=jnp.bfloat16),
            jnp.asarray(a_all, dtype=jnp.bfloat16),
            tiles, n_pad, f_pad, tm, tk)


# ----------------------------------------------------------------------------
# UDAGCN forward (wrapper)
# ----------------------------------------------------------------------------
def udagcn_forward(kp, x_all, a_all, tiles, n_src, n_tgt, n_pad, tm, tk):
    kl2, kc2, kmax2, kl3, kc3, kmax3 = tiles
    emb = encoder_forward(x_all, a_all, kl2, kc2, kmax2, kl3, kc3, kmax3,
                          kp["w1"], kp["b1"], kp["w2"], kp["b2"],
                          kp["aw"], kp["ab"], tm=tm, tk=tk)     # (2, N_pad, E_pad) bf16
    m_pad = 2 * n_pad
    emb_flat = emb.reshape(m_pad, emb.shape[-1])    # contiguous == concat(src, tgt)
    tmh = choose_head_tile(m_pad)
    heads = heads_forward(emb_flat, kp["w1h"], kp["b1h"], kp["w2h"],
                          kp["b2h"], kp["cmask"], tmh=tmh)      # (M_pad, 128) f32
    c = kp["num_class"]
    pred = jnp.concatenate(
        [heads[:n_src, :c], heads[n_pad:n_pad + n_tgt, :c]], axis=0)
    dom = jnp.concatenate(
        [heads[:n_src, c:c + 2], heads[n_pad:n_pad + n_tgt, c:c + 2]], axis=0)
    return pred, dom


# ----------------------------------------------------------------------------
# Pure numpy reference (float64) for sanity checking the kernels
# ----------------------------------------------------------------------------
def reference_forward(p, x_src, ag_s, ap_s, x_tgt, ag_t, ap_t):
    w1 = np.asarray(p["w1"], np.float64); b1 = np.asarray(p["b1"], np.float64)
    w2 = np.asarray(p["w2"], np.float64); b2 = np.asarray(p["b2"], np.float64)
    aw = np.asarray(p["attn_w"], np.float64); ab = np.asarray(p["attn_b"], np.float64)

    def enc(x, ag, ap):
        x = np.asarray(x, np.float64)
        def branch(a):
            h1 = np.maximum(np.asarray(a, np.float64) @ (x @ w1) + b1, 0.0)
            return np.asarray(a, np.float64) @ (h1 @ w2) + b2
        hg, hp = branch(ag), branch(ap)
        sg = hg @ aw + ab
        sp = hp @ aw + ab
        m = np.maximum(sg, sp)
        eg, ep = np.exp(sg - m), np.exp(sp - m)
        wsum = eg + ep
        return hg * (eg / wsum) + hp * (ep / wsum)

    emb = np.concatenate([enc(x_src, ag_s, ap_s), enc(x_tgt, ag_t, ap_t)], axis=0)
    pred = emb @ np.asarray(p["wc"], np.float64) + np.asarray(p["bc"], np.float64)
    hid = np.maximum(emb @ np.asarray(p["wd1"], np.float64)
                     + np.asarray(p["bd1"], np.float64), 0.0)
    dom = hid @ np.asarray(p["wd2"], np.float64) + np.asarray(p["bd2"], np.float64)
    return pred, dom


if __name__ == "__main__":
    # small shapes consistent with the module defaults
    N_src, N_tgt = 64, 64
    input_dim, hid_dim, emb_dim, disc_dim, num_class = 32, 128, 16, 40, 6
    path_len = 10

    key = jax.random.PRNGKey(0)
    ks = jax.random.split(key, 10)

    x_src = jax.random.normal(ks[0], (N_src, input_dim), jnp.float32)
    x_tgt = jax.random.normal(ks[1], (N_tgt, input_dim), jnp.float32)

    # deterministic synthetic graphs: directed ring + chord edges
    def make_edges(n, stride):
        idx = np.arange(n)
        e1 = np.stack([idx, (idx + 1) % n])
        e2 = np.stack([idx, (idx + stride) % n])
        return np.concatenate([e1, e2], axis=1).astype(np.int32)   # (2, 2n)

    edge_src = make_edges(N_src, 5)
    edge_tgt = make_edges(N_tgt, 7)

    # parameter init (deterministic; glorot like the reference, zero biases)
    def glorot(k, shape):
        lim = float(np.sqrt(6.0 / (shape[0] + shape[1])))
        return jax.random.uniform(k, shape, jnp.float32, -lim, lim)

    raw_params = {
        "w1": glorot(ks[2], (input_dim, hid_dim)),
        "b1": jnp.zeros((1, hid_dim), jnp.float32),
        "w2": glorot(ks[3], (hid_dim, emb_dim)),
        "b2": jnp.zeros((1, emb_dim), jnp.float32),
        "attn_w": glorot(ks[4], (emb_dim, 1)),
        "attn_b": jnp.zeros((1, 1), jnp.float32),
        "wc": glorot(ks[5], (emb_dim, num_class)),
        "bc": jnp.zeros((1, num_class), jnp.float32),
        "wd1": glorot(ks[6], (emb_dim, disc_dim)),
        "bd1": jnp.zeros((1, disc_dim), jnp.float32),
        "wd2": glorot(ks[7], (disc_dim, 2)),
        "bd2": jnp.zeros((1, 2), jnp.float32),
    }

    # cached graph preprocessing (host-side glue, as in the PyTorch cache_dict)
    a_gcn_src = gcn_norm_dense(edge_src, N_src)
    a_gcn_tgt = gcn_norm_dense(edge_tgt, N_tgt)
    a_ppmi_src = ppmi_norm_dense(edge_src, N_src, path_len)
    a_ppmi_tgt = ppmi_norm_dense(edge_tgt, N_tgt, path_len)

    x_all, a_all, tiles, n_pad, f_pad, tm, tk = pack_graphs(
        x_src, a_gcn_src, a_ppmi_src, x_tgt, a_gcn_tgt, a_ppmi_tgt)
    kparams = prepare_kernel_params(raw_params, f_pad, hid_dim, emb_dim,
                                    disc_dim, num_class)

    pred_logit, d_logit = udagcn_forward(kparams, x_all, a_all, tiles,
                                         N_src, N_tgt, n_pad, tm, tk)
    jax.block_until_ready((pred_logit, d_logit))

    assert pred_logit.shape == (N_src + N_tgt, num_class)
    assert d_logit.shape == (N_src + N_tgt, 2)
    assert bool(np.isfinite(np.asarray(pred_logit)).all())
    assert bool(np.isfinite(np.asarray(d_logit)).all())

    # sanity check against a float64 numpy reference (loose tolerance: bf16 matmuls)
    pred_ref, dom_ref = reference_forward(raw_params, x_src, a_gcn_src, a_ppmi_src,
                                          x_tgt, a_gcn_tgt, a_ppmi_tgt)
    np.testing.assert_allclose(np.asarray(pred_logit), pred_ref, rtol=0.1, atol=0.1)
    np.testing.assert_allclose(np.asarray(d_logit), dom_ref, rtol=0.1, atol=0.1)

    print("KERNEL_OK")
</pallas_src>

<mosaic_0001>
module attributes {stable_mosaic.version = 11 : i64} {
  func.func @transform1_kernel(%arg0: i32, %arg1: i32, %arg2: i32, %arg3: memref<1x256x128xbf16, #tpu.memory_space<vmem>>, %arg4: memref<128x128xbf16, #tpu.memory_space<vmem>>, %arg5: memref<1x256x128xbf16, #tpu.memory_space<vmem>>, %arg6: memref<256x128xf32, #tpu.memory_space<vmem>>) attributes {dimension_semantics = [#tpu.dimension_semantics<parallel>, #tpu.dimension_semantics<parallel>, #tpu.dimension_semantics<arbitrary>], iteration_bounds = array<i64: 2, 1, 1>, scalar_prefetch = 0 : i64, scratch_operands = 1 : i64, tpu.core_type = #tpu.core_type<tc>, window_params = [{transform_indices = @transform_0, window_bounds = array<i64: 1, 256, 128>}, {transform_indices = @transform_1, window_bounds = array<i64: 128, 128>}, {transform_indices = @transform_2, window_bounds = array<i64: 1, 256, 128>}]} {
    %c0_i32 = arith.constant 0 : i32
    %0 = arith.cmpi eq, %arg2, %c0_i32 : i32
    %1 = arith.extui %0 : i1 to i32
    %c0_i32_0 = arith.constant 0 : i32
    %2 = arith.cmpi ne, %1, %c0_i32_0 : i32
    scf.if %2 {
      %cst_11 = arith.constant 0.000000e+00 : f32
      %13 = vector.broadcast %cst_11 : f32 to vector<256x128xf32>
      %c0_12 = arith.constant 0 : index
      %c0_13 = arith.constant 0 : index
      %14 = vector.load %arg6[%c0_12, %c0_13] : memref<256x128xf32, #tpu.memory_space<vmem>>, vector<256x128xf32>
      tpu.vector_store %arg6[%c0_12, %c0_13], %13 {strides = array<i32>} : memref<256x128xf32, #tpu.memory_space<vmem>>, vector<256x128xf32>,
    } else {
    }
    %c0 = arith.constant 0 : index
    %c0_1 = arith.constant 0 : index
    %3 = vector.load %arg6[%c0, %c0_1] : memref<256x128xf32, #tpu.memory_space<vmem>>, vector<256x128xf32>
    %c0_2 = arith.constant 0 : index
    %c0_3 = arith.constant 0 : index
    %c0_4 = arith.constant 0 : index
    %4 = vector.load %arg3[%c0_2, %c0_3, %c0_4] : memref<1x256x128xbf16, #tpu.memory_space<vmem>>, vector<1x256x128xbf16>
    %5 = vector.shape_cast %4 : vector<1x256x128xbf16> to vector<256x128xbf16>
    %c0_5 = arith.constant 0 : index
    %c0_6 = arith.constant 0 : index
    %6 = vector.load %arg4[%c0_5, %c0_6] : memref<128x128xbf16, #tpu.memory_space<vmem>>, vector<128x128xbf16>
    %cst = arith.constant dense<0.000000e+00> : vector<256x128xf32>
    %7 = tpu.matmul %5, %6, %cst {dimension_numbers = #tpu.dot_dimension_numbers<[1], [0], [0], [1], [0, 0, 1, 1], [], []>} : vector<256x128xbf16>, vector<128x128xbf16>, vector<256x128xf32> -> vector<256x128xf32>
    %8 = arith.addf %3, %7 : vector<256x128xf32>
    %c0_7 = arith.constant 0 : index
    %c0_8 = arith.constant 0 : index
    %9 = vector.load %arg6[%c0_7, %c0_8] : memref<256x128xf32, #tpu.memory_space<vmem>>, vector<256x128xf32>
    tpu.vector_store %arg6[%c0_7, %c0_8], %8 {strides = array<i32>} : memref<256x128xf32, #tpu.memory_space<vmem>>, vector<256x128xf32>,
    %c0_i32_9 = arith.constant 0 : i32
    %10 = arith.cmpi eq, %arg2, %c0_i32_9 : i32
    %11 = arith.extui %10 : i1 to i32
    %c0_i32_10 = arith.constant 0 : i32
    %12 = arith.cmpi ne, %11, %c0_i32_10 : i32
    scf.if %12 {
      %c0_11 = arith.constant 0 : index
      %c0_12 = arith.constant 0 : index
      %13 = vector.load %arg6[%c0_11, %c0_12] : memref<256x128xf32, #tpu.memory_space<vmem>>, vector<256x128xf32>
      %14 = arith.truncf %13 : vector<256x128xf32> to vector<256x128xbf16>
      %c0_13 = arith.constant 0 : index
      %c0_14 = arith.constant 0 : index
      %c0_15 = arith.constant 0 : index
      %15 = vector.load %arg5[%c0_13, %c0_14, %c0_15] : memref<1x256x128xbf16, #tpu.memory_space<vmem>>, vector<1x256x128xbf16>
      %16 = vector.shape_cast %15 : vector<1x256x128xbf16> to vector<256x128xbf16>
      %17 = vector.shape_cast %14 : vector<256x128xbf16> to vector<1x256x128xbf16>
      tpu.vector_store %arg5[%c0_13, %c0_14, %c0_15], %17 {strides = array<i32>} : memref<1x256x128xbf16, #tpu.memory_space<vmem>>, vector<1x256x128xbf16>,
    } else {
    }
    return
  }
  func.func @transform_0(%arg0: i32, %arg1: i32, %arg2: i32) -> (i32, i32, i32) {
    %c0_i32 = arith.constant 0 : i32
    return %arg0, %arg1, %arg2 : i32, i32, i32
  }
  func.func @transform_1(%arg0: i32, %arg1: i32, %arg2: i32) -> (i32, i32) {
    %c0_i32 = arith.constant 0 : i32
    %c0_i32_0 = arith.constant 0 : i32
    return %arg2, %c0_i32 : i32, i32
  }
  func.func @transform_2(%arg0: i32, %arg1: i32, %arg2: i32) -> (i32, i32, i32) {
    %c0_i32 = arith.constant 0 : i32
    %c0_i32_0 = arith.constant 0 : i32
    return %arg0, %arg1, %c0_i32 : i32, i32, i32
  }
}

</mosaic_0001>

<llo_original>
// kernel: tpu_custom_call.1
$region0: #{tpu_custom_call.1}
  #allocation0 [shape = 'u32[]', space=smem, size = 0x4, offset = 0x4, fixed_abs, tag = 'smem constant byte address 0x4 - core index']
  #allocation1 [shape = 'u32[144,128]{1,0:T(1,128)}', space=vmem, size = 0x12000, scoped, tag = 'internal scratch']
  #allocation2 [shape = 'f32[256,128]{1,0:T(8,128)}', space=vmem, size = 0x20000, scoped, tag = 'scratch operand']
  %s0 = inlined_call_operand.hbm [shape: bf16[2,256,128], index: 0, kind: input, shape index: {}]
  %s1 = inlined_call_operand.hbm [shape: bf16[128,128], index: 1, kind: input, shape index: {}]
  %s2 = inlined_call_operand.hbm [shape: bf16[2,256,128], index: 2, kind: output, shape index: {}]
  %s3 = sld [smem:[#allocation0]]
  $region57: #{tpu_custom_call.1} parent=0
    _
  %s5 = ssub.s32 1, %s3
  %s6 = scalar_select 0, %s5, %s3
  $region1: #{tpu_custom_call.1} parent=0
    #allocation3 [shape = 'u8[131072]{0}', space=vmem, size = 0x20000, scoped, tag = 'input window, operand 0']
    #allocation4 [shape = 's32[2]{0}', space=sflag, size = 0x8, scoped, tag = 'scoped memory for tpu_custom_call.1']
    #allocation5 [shape = 's32[2]{0}', space=sflag, size = 0x8, scoped, tag = 'scoped memory for tpu_custom_call.1']
    #allocation6 [shape = 'u8[32768]{0}', space=vmem, size = 0x8000, scoped, tag = 'input window, operand 1, single buffered']
    #allocation7 [shape = 's32[1]{0}', space=sflag, size = 0x4, scoped, tag = 'scoped memory for tpu_custom_call.1']
    #allocation8 [shape = 'u8[131072]{0}', space=vmem, size = 0x20000, scoped, tag = 'output window, operand 0']
    %7 = vsyncpa [#allocation4], 0
    %s8 = scalar_lea.sflag [#allocation4], 1
    %9 = vsyncpa %s8, 0
    %10 = vsyncpa [#allocation7], 0
    %11 = vsyncpa [#allocation5], 0
    %s12 = scalar_lea.sflag [#allocation5], 1
    %13 = vsyncpa %s12, 0
    loop: start=0, step=1, limit=4
    $region2: #{tpu_custom_call.1} parent=1 // loop_pre_header
      _
    $region3: #{tpu_custom_call.1} parent=1 // loop_header
      %s15 = sphi 0, %s19
      %p16 = scmp.ge.s32.totalorder %s15, 4
      %s22 = sphi 0, %s41
      %s23 = sphi 0, %s37
      %s24 = sphi 0, %s33
      %s25 = sphi 0, %s22
      %s26 = sphi 0, %s23
      %s27 = sphi 0, %s24
      %s28 = sphi 0, %s25
      %s29 = sphi 0, %s26
      %s30 = sphi 0, %s27
      %s48 = sphi 0, %s50
      %s51 = sphi 0, %s48
      %s52 = sphi 0, %s51
      %s68 = sphi 0, %s52
      %s74 = sphi 0, %s76
      %s77 = sphi 0, %s74
      %s78 = sphi 0, %s77
      %s94 = sphi 0, %s78
      %s102 = sphi 0, %s104
      %s105 = sphi 0, %s102
      %s106 = sphi 0, %s105
      %s122 = sphi 0, %s106
    $region4: #{tpu_custom_call.1} parent=1 // loop_header_branch
      %18 = sbr.rel (%p16) target = $region8
    $region5: #{tpu_custom_call.1} parent=1 // loop_body
      %s20 = ssub.s32 %s15, 1
      %s21 = ssub.s32 %s15, 2
      %s31 = sadd.s32 1, %s24
      %p32 = scmp.ge.s32.totalorder %s31, 1
      %s33 = scalar_select %p32, 0, %s31
      %s34 = sadd.s32 1, %s23
      %s35 = scalar_select %p32, %s34, %s23
      %p36 = scmp.ge.s32.totalorder %s35, 1
      %s37 = scalar_select %p36, 0, %s35
      %s38 = sadd.s32 1, %s22
      %s39 = scalar_select %p36, %s38, %s22
      %p40 = scmp.ge.s32.totalorder %s39, 2
      %s41 = scalar_select %p40, 0, %s39
      %s42 = ssub.s32 %s22, %s41
      %s43 = ssub.s32 %s23, %s37
      %s44 = sor.u32 %s42, %s43
      %s45 = ssub.s32 %s24, %s33
      %s46 = sor.u32 %s44, %s45
      %p47 = scmp.eq.s32.totalorder %s46, 0
      %s49 = sadd.s32 %s48, 1
      %s50 = scalar_select %p47, %s48, %s49
      %p53 = pneg %p47
      %p54 = scmp.eq.s32.totalorder %s15, 1
      %p55 = por %p53, %p54
      %p56 = scmp.ne.s32.totalorder %s48, %s51
      %p57 = scmp.eq.s32.totalorder %s15, 0
      %p58 = por %p56, %p57
      %p59 = scmp.ne.s32.totalorder %s48, %s51
      %p60 = scmp.eq.s32.totalorder %s20, 1
      %p61 = por %p59, %p60
      %p62 = scmp.ne.s32.totalorder %s51, %s52
      %p63 = scmp.eq.s32.totalorder %s20, 0
      %p64 = por %p62, %p63
      %p65 = scmp.ne.s32.totalorder %s51, %s52
      %p66 = scmp.eq.s32.totalorder %s21, 1
      %p67 = por %p65, %p66
      %p69 = scmp.ne.s32.totalorder %s52, %s68
      %p70 = scmp.eq.s32.totalorder %s21, 0
      %p71 = por %p69, %p70
      %s72 = ssub.s32 %s24, %s33
      %p73 = scmp.eq.s32.totalorder %s72, 0
      %s75 = sadd.s32 %s74, 1
      %s76 = scalar_select %p73, %s74, %s75
      %p79 = pneg %p73
      %p80 = scmp.eq.s32.totalorder %s15, 1
      %p81 = por %p79, %p80
      %p82 = scmp.ne.s32.totalorder %s74, %s77
      %p83 = scmp.eq.s32.totalorder %s15, 0
      %p84 = por %p82, %p83
      %p85 = scmp.ne.s32.totalorder %s74, %s77
      %p86 = scmp.eq.s32.totalorder %s20, 1
      %p87 = por %p85, %p86
      %p88 = scmp.ne.s32.totalorder %s77, %s78
      %p89 = scmp.eq.s32.totalorder %s20, 0
      %p90 = por %p88, %p89
      %p91 = scmp.ne.s32.totalorder %s77, %s78
      %p92 = scmp.eq.s32.totalorder %s21, 1
      %p93 = por %p91, %p92
      %p95 = scmp.ne.s32.totalorder %s78, %s94
      %p96 = scmp.eq.s32.totalorder %s21, 0
      %p97 = por %p95, %p96
      %s98 = ssub.s32 %s22, %s41
      %s99 = ssub.s32 %s23, %s37
      %s100 = sor.u32 %s98, %s99
      %p101 = scmp.eq.s32.totalorder %s100, 0
      %s103 = sadd.s32 %s102, 1
      %s104 = scalar_select %p101, %s102, %s103
      %p107 = pneg %p101
      %p108 = scmp.eq.s32.totalorder %s15, 1
      %p109 = por %p107, %p108
      %p110 = scmp.ne.s32.totalorder %s102, %s105
      %p111 = scmp.eq.s32.totalorder %s15, 0
      %p112 = por %p110, %p111
      %p113 = scmp.ne.s32.totalorder %s102, %s105
      %p114 = scmp.eq.s32.totalorder %s20, 1
      %p115 = por %p113, %p114
      %p116 = scmp.ne.s32.totalorder %s105, %s106
      %p117 = scmp.eq.s32.totalorder %s20, 0
      %p118 = por %p116, %p117
      %p119 = scmp.ne.s32.totalorder %s105, %s106
      %p120 = scmp.eq.s32.totalorder %s21, 1
      %p121 = por %p119, %p120
      %p123 = scmp.ne.s32.totalorder %s106, %s122
      %p124 = scmp.eq.s32.totalorder %s21, 0
      %p125 = por %p123, %p124
      %p126 = scmp.le.s32.totalorder 1, %s15
      %p127 = scmp.lt.s32.totalorder %s15, 3
      %p128 = pnand %p126, %p127
      %p129 = pneg %p128
      // Predicated region
      $region9: #{tpu_custom_call.1} parent=5 // pred_check
        _
      $region10: #{tpu_custom_call.1} parent=5 // pred_check_branch
        %131 = sbr.rel (%p128) target = $region12
      $region11: #{tpu_custom_call.1} parent=5 // pred_region
        %s132 = ssub.s32 %s15, 1
        // Predicated region
        $region13: #{tpu_custom_call.1} parent=11 // pred_check
          %p133 = pneg %p90
        $region14: #{tpu_custom_call.1} parent=11 // pred_check_branch
          %135 = sbr.rel (%p133) target = $region16
        $region15: #{tpu_custom_call.1} parent=11 // pred_region
          %s136 = smul.u32 16, %s27
          %s138 = ssub.s32 1024, 1024
          %139 = vsyncadd [#allocation7], %s138
          %s140 = smul.addr %s136, 64
          %s141 = scalar_lea.hbm %s1, %s140
          %s142 = sshll.u32 [#allocation6], 4
          %s143 = int_to_ptr.vmem [resolvable:$true] %s142
          %148 = dma.hbm_to_vmem [thread:$0]  %s141, 1024, %s143, [#allocation7], 64, 64, 4
        $region16: #{tpu_custom_call.1} parent=11 // pred_fallthru
          _
      $region12: #{tpu_custom_call.1} parent=5 // pred_fallthru
        _
      %p149 = scmp.lt.s32.totalorder %s15, 2
      // Predicated region
      $region17: #{tpu_custom_call.1} parent=5 // pred_check
        %p150 = pneg %p149
      $region18: #{tpu_custom_call.1} parent=5 // pred_check_branch
        %152 = sbr.rel (%p150) target = $region20
      $region19: #{tpu_custom_call.1} parent=5 // pred_region
        // Predicated region
        $region21: #{tpu_custom_call.1} parent=19 // pred_check
          %p153 = pneg %p58
        $region22: #{tpu_custom_call.1} parent=19 // pred_check_branch
          %155 = sbr.rel (%p153) target = $region24
        $region23: #{tpu_custom_call.1} parent=19 // pred_region
          %s156 = sand.u32 %s48, 1
          %s157 = scalar_lea.sflag [#allocation4], %s156
          %s158 = sand.u32 %s48, 1
          %s159 = smul.addr %s158, 128
          %s160 = scalar_lea.vmem [#allocation3], %s159
          %s161 = smul.u32 32, %s23
          %s163 = ssub.s32 2048, 2048
          %164 = vsyncadd %s157, %s163
          %s165 = sadd.s32 %s24, %s161
          %s166 = smul.addr %s22, 32
          %s167 = sadd.s32 %s165, %s166
          %s168 = smul.addr %s167, 64
          %s169 = scalar_lea.hbm %s0, %s168
          %s170 = sshll.u32 %s160, 4
          %s171 = int_to_ptr.vmem [resolvable:$true] %s170
          %176 = dma.hbm_to_vmem [thread:$0]  %s169, 2048, %s171, %s157, 64, 64, 4
        $region24: #{tpu_custom_call.1} parent=19 // pred_fallthru
          _
      $region20: #{tpu_custom_call.1} parent=5 // pred_fallthru
        _
      %p177 = scmp.le.s32.totalorder 1, %s15
      %p178 = scmp.lt.s32.totalorder %s15, 3
      %p179 = pnand %p177, %p178
      %p180 = pneg %p179
      // Predicated region
      $region25: #{tpu_custom_call.1} parent=5 // pred_check
        _
      $region26: #{tpu_custom_call.1} parent=5 // pred_check_branch
        %182 = sbr.rel (%p179) target = $region28
      $region27: #{tpu_custom_call.1} parent=5 // pred_region
        %s183 = ssub.s32 %s15, 1
        %s184 = sand.u32 %s51, 1
        %s185 = scalar_lea.sflag [#allocation4], %s184
        %s186 = sand.u32 %s51, 1
        %s187 = smul.addr %s186, 128
        %s188 = scalar_lea.vmem [#allocation3], %s187
        // Predicated region
        $region29: #{tpu_custom_call.1} parent=27 // pred_check
          %p189 = pneg %p64
        $region30: #{tpu_custom_call.1} parent=27 // pred_check_branch
          %191 = sbr.rel (%p189) target = $region32
        $region31: #{tpu_custom_call.1} parent=27 // pred_region
          %192 = dma.done %s185, 2048
        $region32: #{tpu_custom_call.1} parent=27 // pred_fallthru
          _
        // Predicated region
        $region33: #{tpu_custom_call.1} parent=27 // pred_check
          %p193 = pneg %p90
        $region34: #{tpu_custom_call.1} parent=27 // pred_check_branch
          %195 = sbr.rel (%p193) target = $region36
        $region35: #{tpu_custom_call.1} parent=27 // pred_region
          %196 = dma.done [#allocation7], 1024
        $region36: #{tpu_custom_call.1} parent=27 // pred_fallthru
          _
        %s197 = sand.u32 %s51, 1
        %s198 = scalar_lea.sflag [#allocation4], %s197
        %s199 = sand.u32 %s51, 1
        %s200 = smul.addr %s199, 128
        %s201 = scalar_lea.vmem [#allocation3], %s200
        %p202 = pneg %p64
        %p203 = pneg %p61
        %p204 = pneg %p90
        %p205 = pneg %p87
        %p206 = pneg %p118
        %p207 = pneg %p115
        %s208 = sand.u32 %s105, 1
        %s209 = scalar_lea.sflag [#allocation5], %s208
        %s210 = sand.u32 %s105, 1
        %s211 = smul.addr %s210, 128
        %s212 = scalar_lea.vmem [#allocation8], %s211
        %s213 = smul.u32 32, %s26
        %s214 = smul.u32 16, %s27
        %s215 = smul.u32 32, %s26
        %p217 = scmp.eq.s32.totalorder %s27, 0
        // Predicated region
        $region37: #{tpu_custom_call.1} parent=27 // pred_check
          %p218 = pneg %p217
        $region38: #{tpu_custom_call.1} parent=27 // pred_check_branch
          %220 = sbr.rel (%p218) target = $region40
        $region39: #{tpu_custom_call.1} parent=27 // pred_region
          %221 = vst [vmem:[#allocation2] sm:$0xff] 0.0
          %222 = vst [vmem:[#allocation2 + $0x8] sm:$0xff] 0.0
          %223 = vst [vmem:[#allocation2 + $0x10] sm:$0xff] 0.0
          %224 = vst [vmem:[#allocation2 + $0x18] sm:$0xff] 0.0
          %225 = vst [vmem:[#allocation2 + $0x20] sm:$0xff] 0.0
          %226 = vst [vmem:[#allocation2 + $0x28] sm:$0xff] 0.0
          %227 = vst [vmem:[#allocation2 + $0x30] sm:$0xff] 0.0
          %228 = vst [vmem:[#allocation2 + $0x38] sm:$0xff] 0.0
          %229 = vst [vmem:[#allocation2 + $0x40] sm:$0xff] 0.0
          %230 = vst [vmem:[#allocation2 + $0x48] sm:$0xff] 0.0
          %231 = vst [vmem:[#allocation2 + $0x50] sm:$0xff] 0.0
          %232 = vst [vmem:[#allocation2 + $0x58] sm:$0xff] 0.0
          %233 = vst [vmem:[#allocation2 + $0x60] sm:$0xff] 0.0
          %234 = vst [vmem:[#allocation2 + $0x68] sm:$0xff] 0.0
          %235 = vst [vmem:[#allocation2 + $0x70] sm:$0xff] 0.0
          %236 = vst [vmem:[#allocation2 + $0x78] sm:$0xff] 0.0
          %237 = vst [vmem:[#allocation2 + $0x80] sm:$0xff] 0.0
          %238 = vst [vmem:[#allocation2 + $0x88] sm:$0xff] 0.0
          %239 = vst [vmem:[#allocation2 + $0x90] sm:$0xff] 0.0
          %240 = vst [vmem:[#allocation2 + $0x98] sm:$0xff] 0.0
          %241 = vst [vmem:[#allocation2 + $0xa0] sm:$0xff] 0.0
          %242 = vst [vmem:[#allocation2 + $0xa8] sm:$0xff] 0.0
          %243 = vst [vmem:[#allocation2 + $0xb0] sm:$0xff] 0.0
          %244 = vst [vmem:[#allocation2 + $0xb8] sm:$0xff] 0.0
          %245 = vst [vmem:[#allocation2 + $0xc0] sm:$0xff] 0.0
          %246 = vst [vmem:[#allocation2 + $0xc8] sm:$0xff] 0.0
          %247 = vst [vmem:[#allocation2 + $0xd0] sm:$0xff] 0.0
          %248 = vst [vmem:[#allocation2 + $0xd8] sm:$0xff] 0.0
          %249 = vst [vmem:[#allocation2 + $0xe0] sm:$0xff] 0.0
          %250 = vst [vmem:[#allocation2 + $0xe8] sm:$0xff] 0.0
          %251 = vst [vmem:[#allocation2 + $0xf0] sm:$0xff] 0.0
          %252 = vst [vmem:[#allocation2 + $0xf8] sm:$0xff] 0.0
        $region40: #{tpu_custom_call.1} parent=27 // pred_fallthru
          _
        %v253 = vld [vmem:[#allocation2] sm:$0xff]
        %v254 = vld [vmem:[#allocation2 + $0x8] sm:$0xff]
        %v255 = vld [vmem:[#allocation2 + $0x10] sm:$0xff]
        %v256 = vld [vmem:[#allocation2 + $0x18] sm:$0xff]
        %v257 = vld [vmem:[#allocation2 + $0x20] sm:$0xff]
        %v258 = vld [vmem:[#allocation2 + $0x28] sm:$0xff]
        %v259 = vld [vmem:[#allocation2 + $0x30] sm:$0xff]
        %v260 = vld [vmem:[#allocation2 + $0x38] sm:$0xff]
        %v261 = vld [vmem:[#allocation2 + $0x40] sm:$0xff]
        %v262 = vld [vmem:[#allocation2 + $0x48] sm:$0xff]
        %v263 = vld [vmem:[#allocation2 + $0x50] sm:$0xff]
        %v264 = vld [vmem:[#allocation2 + $0x58] sm:$0xff]
        %v265 = vld [vmem:[#allocation2 + $0x60] sm:$0xff]
        %v266 = vld [vmem:[#allocation2 + $0x68] sm:$0xff]
        %v267 = vld [vmem:[#allocation2 + $0x70] sm:$0xff]
        %v268 = vld [vmem:[#allocation2 + $0x78] sm:$0xff]
        %v269 = vld [vmem:[#allocation2 + $0x80] sm:$0xff]
        %v270 = vld [vmem:[#allocation2 + $0x88] sm:$0xff]
        %v271 = vld [vmem:[#allocation2 + $0x90] sm:$0xff]
        %v272 = vld [vmem:[#allocation2 + $0x98] sm:$0xff]
        %v273 = vld [vmem:[#allocation2 + $0xa0] sm:$0xff]
        %v274 = vld [vmem:[#allocation2 + $0xa8] sm:$0xff]
        %v275 = vld [vmem:[#allocation2 + $0xb0] sm:$0xff]
        %v276 = vld [vmem:[#allocation2 + $0xb8] sm:$0xff]
        %v277 = vld [vmem:[#allocation2 + $0xc0] sm:$0xff]
        %v278 = vld [vmem:[#allocation2 + $0xc8] sm:$0xff]
        %v279 = vld [vmem:[#allocation2 + $0xd0] sm:$0xff]
        %v280 = vld [vmem:[#allocation2 + $0xd8] sm:$0xff]
        %v281 = vld [vmem:[#allocation2 + $0xe0] sm:$0xff]
        %v282 = vld [vmem:[#allocation2 + $0xe8] sm:$0xff]
        %v283 = vld [vmem:[#allocation2 + $0xf0] sm:$0xff]
        %v284 = vld [vmem:[#allocation2 + $0xf8] sm:$0xff]
        %v285 = vld [vmem:[%s188] sm:$0xf]
        %v286 = vld [vmem:[%s188 + $0x4] sm:$0xf]
        %v287 = vld [vmem:[%s188 + $0x8] sm:$0xf]
        %v288 = vld [vmem:[%s188 + $0xc] sm:$0xf]
        %v289 = vld [vmem:[%s188 + $0x10] sm:$0xf]
        %v290 = vld [vmem:[%s188 + $0x14] sm:$0xf]
        %v291 = vld [vmem:[%s188 + $0x18] sm:$0xf]
        %v292 = vld [vmem:[%s188 + $0x1c] sm:$0xf]
        %v293 = vld [vmem:[%s188 + $0x20] sm:$0xf]
        %v294 = vld [vmem:[%s188 + $0x24] sm:$0xf]
        %v295 = vld [vmem:[%s188 + $0x28] sm:$0xf]
        %v296 = vld [vmem:[%s188 + $0x2c] sm:$0xf]
        %v297 = vld [vmem:[%s188 + $0x30] sm:$0xf]
        %v298 = vld [vmem:[%s188 + $0x34] sm:$0xf]
        %v299 = vld [vmem:[%s188 + $0x38] sm:$0xf]
        %v300 = vld [vmem:[%s188 + $0x3c] sm:$0xf]
        %v301 = vld [vmem:[%s188 + $0x40] sm:$0xf]
        %v302 = vld [vmem:[%s188 + $0x44] sm:$0xf]
        %v303 = vld [vmem:[%s188 + $0x48] sm:$0xf]
        %v304 = vld [vmem:[%s188 + $0x4c] sm:$0xf]
        %v305 = vld [vmem:[%s188 + $0x50] sm:$0xf]
        %v306 = vld [vmem:[%s188 + $0x54] sm:$0xf]
        %v307 = vld [vmem:[%s188 + $0x58] sm:$0xf]
        %v308 = vld [vmem:[%s188 + $0x5c] sm:$0xf]
        %v309 = vld [vmem:[%s188 + $0x60] sm:$0xf]
        %v310 = vld [vmem:[%s188 + $0x64] sm:$0xf]
        %v311 = vld [vmem:[%s188 + $0x68] sm:$0xf]
        %v312 = vld [vmem:[%s188 + $0x6c] sm:$0xf]
        %v313 = vld [vmem:[%s188 + $0x70] sm:$0xf]
        %v314 = vld [vmem:[%s188 + $0x74] sm:$0xf]
        %v315 = vld [vmem:[%s188 + $0x78] sm:$0xf]
        %v316 = vld [vmem:[%s188 + $0x7c] sm:$0xf]
        %v317 = vld [vmem:[#allocation6] sm:$0xf]
        %v318 = vld [vmem:[#allocation6 + $0x4] sm:$0xf]
        %v319 = vld [vmem:[#allocation6 + $0x8] sm:$0xf]
        %v320 = vld [vmem:[#allocation6 + $0xc] sm:$0xf]
        %v321 = vld [vmem:[#allocation6 + $0x10] sm:$0xf]
        %v322 = vld [vmem:[#allocation6 + $0x14] sm:$0xf]
        %v323 = vld [vmem:[#allocation6 + $0x18] sm:$0xf]
        %v324 = vld [vmem:[#allocation6 + $0x1c] sm:$0xf]
        %v325 = vld [vmem:[#allocation6 + $0x20] sm:$0xf]
        %v326 = vld [vmem:[#allocation6 + $0x24] sm:$0xf]
        %v327 = vld [vmem:[#allocation6 + $0x28] sm:$0xf]
        %v328 = vld [vmem:[#allocation6 + $0x2c] sm:$0xf]
        %v329 = vld [vmem:[#allocation6 + $0x30] sm:$0xf]
        %v330 = vld [vmem:[#allocation6 + $0x34] sm:$0xf]
        %v331 = vld [vmem:[#allocation6 + $0x38] sm:$0xf]
        %v332 = vld [vmem:[#allocation6 + $0x3c] sm:$0xf]
        %v365 = vunpack.c.l.b16 %v285
        %v366 = vunpack.c.l.b16 %v286
        %v367 = vunpack.c.l.b16 %v287
        %v368 = vunpack.c.l.b16 %v288
        %v369 = vunpack.c.l.b16 %v289
        %v370 = vunpack.c.l.b16 %v290
        %v371 = vunpack.c.l.b16 %v291
        %v372 = vunpack.c.l.b16 %v292
        %v373 = vunpack.c.l.b16 %v293
        %v374 = vunpack.c.l.b16 %v294
        %v375 = vunpack.c.l.b16 %v295
        %v376 = vunpack.c.l.b16 %v296
        %v377 = vunpack.c.l.b16 %v297
        %v378 = vunpack.c.l.b16 %v298
        %v379 = vunpack.c.l.b16 %v299
        %v380 = vunpack.c.l.b16 %v300
        %v381 = vunpack.c.l.b16 %v301
        %v382 = vunpack.c.l.b16 %v302
        %v383 = vunpack.c.l.b16 %v303
        %v384 = vunpack.c.l.b16 %v304
        %v385 = vunpack.c.l.b16 %v305
        %v386 = vunpack.c.l.b16 %v306
        %v387 = vunpack.c.l.b16 %v307
        %v388 = vunpack.c.l.b16 %v308
        %v389 = vunpack.c.l.b16 %v309
        %v390 = vunpack.c.l.b16 %v310
        %v391 = vunpack.c.l.b16 %v311
        %v392 = vunpack.c.l.b16 %v312
        %v393 = vunpack.c.l.b16 %v313
        %v394 = vunpack.c.l.b16 %v314
        %v395 = vunpack.c.l.b16 %v315
        %v396 = vunpack.c.l.b16 %v316
        %v397 = vpack.c.b16 %v366, %v365
        %v398 = vpack.c.b16 %v368, %v367
        %v399 = vpack.c.b16 %v370, %v369
        %v400 = vpack.c.b16 %v372, %v371
        %v401 = vpack.c.b16 %v374, %v373
        %v402 = vpack.c.b16 %v376, %v375
        %v403 = vpack.c.b16 %v378, %v377
        %v404 = vpack.c.b16 %v380, %v379
        %v405 = vpack.c.b16 %v382, %v381
        %v406 = vpack.c.b16 %v384, %v383
        %v407 = vpack.c.b16 %v386, %v385
        %v408 = vpack.c.b16 %v388, %v387
        %v409 = vpack.c.b16 %v390, %v389
        %v410 = vpack.c.b16 %v392, %v391
        %v411 = vpack.c.b16 %v394, %v393
        %v412 = vpack.c.b16 %v396, %v395
        %v445 = vunpack.c.l.b16 %v317
        %v446 = vunpack.c.l.b16 %v318
        %v447 = vunpack.c.l.b16 %v319
        %v448 = vunpack.c.l.b16 %v320
        %v449 = vunpack.c.l.b16 %v321
        %v450 = vunpack.c.l.b16 %v322
        %v451 = vunpack.c.l.b16 %v323
        %v452 = vunpack.c.l.b16 %v324
        %v453 = vunpack.c.l.b16 %v325
        %v454 = vunpack.c.l.b16 %v326
        %v455 = vunpack.c.l.b16 %v327
        %v456 = vunpack.c.l.b16 %v328
        %v457 = vunpack.c.l.b16 %v329
        %v458 = vunpack.c.l.b16 %v330
        %v459 = vunpack.c.l.b16 %v331
        %v460 = vunpack.c.l.b16 %v332
        %v461 = vpack.c.b16 %v446, %v445
        %v462 = vpack.c.b16 %v448, %v447
        %v463 = vpack.c.b16 %v450, %v449
        %v464 = vpack.c.b16 %v452, %v451
        %v465 = vpack.c.b16 %v454, %v453
        %v466 = vpack.c.b16 %v456, %v455
        %v467 = vpack.c.b16 %v458, %v457
        %v468 = vpack.c.b16 %v460, %v459
        %477 = vmatprep.subr.bf16.mxu0 0
        %478 = vmatpush1.bf16.msra.mxu0 %v468
        %479 = vmatprep.subr.bf16.mxu0 0
        %480 = vmatpush1.bf16.msra.mxu0 %v467
        %481 = vmatprep.subr.bf16.mxu0 0
        %482 = vmatpush1.bf16.msra.mxu0 %v466
        %483 = vmatprep.subr.bf16.mxu0 0
        %484 = vmatpush1.bf16.msra.mxu0 %v465
        %485 = vmatprep.subr.bf16.mxu0 0
        %486 = vmatpush1.bf16.msra.mxu0 %v464
        %487 = vmatprep.subr.bf16.mxu0 0
        %488 = vmatpush1.bf16.msra.mxu0 %v463
        %489 = vmatprep.subr.bf16.mxu0 0
        %490 = vmatpush1.bf16.msra.mxu0 %v462
        %491 = vmatprep.subr.bf16.mxu0 0
        %492 = vmatpush1.bf16.msra.mxu0 %v461
        %493 = vmatprep.subr.bf16.mxu0 0
        %494 = vmatpush2.bf16.msra.mxu0 0
        %495 = vmatprep.subr.bf16.mxu0 0
        %496 = vmatpush2.bf16.msra.mxu0 0
        %497 = vmatprep.subr.bf16.mxu0 0
        %498 = vmatpush2.bf16.msra.mxu0 0
        %499 = vmatprep.subr.bf16.mxu0 0
        %500 = vmatpush2.bf16.msra.mxu0 0
        %501 = vmatprep.subr.bf16.mxu0 0
        %502 = vmatpush2.bf16.msra.mxu0 0
        %503 = vmatprep.subr.bf16.mxu0 0
        %504 = vmatpush2.bf16.msra.mxu0 0
        %505 = vmatprep.subr.bf16.mxu0 0
        %506 = vmatpush2.bf16.msra.mxu0 0
        %507 = vmatprep.subr.bf16.mxu0 0
        %508 = vmatpush2.bf16.msra.mxu0 0
        %509 = vmatprep.mubr.bf16.mxu0 0
        %510 = vmatmul.mubr.bf16.gmra.mxu0 %v397
        %v511 = vpop.f32.mrf.mxu0
        %v512 = vadd.f32 0.0, %v511
        %v513 = vpop.f32.mrf.mxu0
        %v514 = vpop.f32.mrf.mxu0
        %v515 = vadd.f32 0.0, %v514
        %v516 = vpop.f32.mrf.mxu0
        %517 = vmatprep.mubr.bf16.mxu0 0
        %518 = vmatmul.mubr.bf16.gmra.mxu0 %v398
        %v519 = vpop.f32.mrf.mxu0
        %v520 = vadd.f32 0.0, %v519
        %v521 = vpop.f32.mrf.mxu0
        %v522 = vpop.f32.mrf.mxu0
        %v523 = vadd.f32 0.0, %v522
        %v524 = vpop.f32.mrf.mxu0
        %525 = vmatprep.mubr.bf16.mxu0 0
        %526 = vmatmul.mubr.bf16.gmra.mxu0 %v399
        %v527 = vpop.f32.mrf.mxu0
        %v528 = vadd.f32 0.0, %v527
        %v529 = vpop.f32.mrf.mxu0
        %v530 = vpop.f32.mrf.mxu0
        %v531 = vadd.f32 0.0, %v530
        %v532 = vpop.f32.mrf.mxu0
        %533 = vmatprep.mubr.bf16.mxu0 0
        %534 = vmatmul.mubr.bf16.gmra.mxu0 %v400
        %v535 = vpop.f32.mrf.mxu0
        %v536 = vadd.f32 0.0, %v535
        %v537 = vpop.f32.mrf.mxu0
        %v538 = vpop.f32.mrf.mxu0
        %v539 = vadd.f32 0.0, %v538
        %v540 = vpop.f32.mrf.mxu0
        %541 = vmatprep.mubr.bf16.mxu0 0
        %542 = vmatmul.mubr.bf16.gmra.mxu0 %v401
        %v543 = vpop.f32.mrf.mxu0
        %v544 = vadd.f32 0.0, %v543
        %v545 = vpop.f32.mrf.mxu0
        %v546 = vpop.f32.mrf.mxu0
        %v547 = vadd.f32 0.0, %v546
        %v548 = vpop.f32.mrf.mxu0
        %549 = vmatprep.mubr.bf16.mxu0 0
        %550 = vmatmul.mubr.bf16.gmra.mxu0 %v402
        %v551 = vpop.f32.mrf.mxu0
        %v552 = vadd.f32 0.0, %v551
        %v553 = vpop.f32.mrf.mxu0
        %v554 = vpop.f32.mrf.mxu0
        %v555 = vadd.f32 0.0, %v554
        %v556 = vpop.f32.mrf.mxu0
        %557 = vmatprep.mubr.bf16.mxu0 0
        %558 = vmatmul.mubr.bf16.gmra.mxu0 %v403
        %v559 = vpop.f32.mrf.mxu0
        %v560 = vadd.f32 0.0, %v559
        %v561 = vpop.f32.mrf.mxu0
        %v562 = vpop.f32.mrf.mxu0
        %v563 = vadd.f32 0.0, %v562
        %v564 = vpop.f32.mrf.mxu0
        %565 = vmatprep.mubr.bf16.mxu0 0
        %566 = vmatmul.mubr.bf16.gmra.mxu0 %v404
        %v567 = vpop.f32.mrf.mxu0
        %v568 = vadd.f32 0.0, %v567
        %v569 = vpop.f32.mrf.mxu0
        %v570 = vpop.f32.mrf.mxu0
        %v571 = vadd.f32 0.0, %v570
        %v572 = vpop.f32.mrf.mxu0
        %573 = vmatprep.mubr.bf16.mxu0 0
        %574 = vmatmul.mubr.bf16.gmra.mxu0 %v405
        %v575 = vpop.f32.mrf.mxu0
        %v576 = vadd.f32 0.0, %v575
        %v577 = vpop.f32.mrf.mxu0
        %v578 = vpop.f32.mrf.mxu0
        %v579 = vadd.f32 0.0, %v578
        %v580 = vpop.f32.mrf.mxu0
        %581 = vmatprep.mubr.bf16.mxu0 0
        %582 = vmatmul.mubr.bf16.gmra.mxu0 %v406
        %v583 = vpop.f32.mrf.mxu0
        %v584 = vadd.f32 0.0, %v583
        %v585 = vpop.f32.mrf.mxu0
        %v586 = vpop.f32.mrf.mxu0
        %v587 = vadd.f32 0.0, %v586
        %v588 = vpop.f32.mrf.mxu0
        %589 = vmatprep.mubr.bf16.mxu0 0
        %590 = vmatmul.mubr.bf16.gmra.mxu0 %v407
        %v591 = vpop.f32.mrf.mxu0
        %v592 = vadd.f32 0.0, %v591
        %v593 = vpop.f32.mrf.mxu0
        %v594 = vpop.f32.mrf.mxu0
        %v595 = vadd.f32 0.0, %v594
        %v596 = vpop.f32.mrf.mxu0
        %597 = vmatprep.mubr.bf16.mxu0 0
        %598 = vmatmul.mubr.bf16.gmra.mxu0 %v408
        %v599 = vpop.f32.mrf.mxu0
        %v600 = vadd.f32 0.0, %v599
        %v601 = vpop.f32.mrf.mxu0
        %v602 = vpop.f32.mrf.mxu0
        %v603 = vadd.f32 0.0, %v602
        %v604 = vpop.f32.mrf.mxu0
        %605 = vmatprep.mubr.bf16.mxu0 0
        %606 = vmatmul.mubr.bf16.gmra.mxu0 %v409
        %v607 = vpop.f32.mrf.mxu0
        %v608 = vadd.f32 0.0, %v607
        %v609 = vpop.f32.mrf.mxu0
        %v610 = vpop.f32.mrf.mxu0
        %v611 = vadd.f32 0.0, %v610
        %v612 = vpop.f32.mrf.mxu0
        %613 = vmatprep.mubr.bf16.mxu0 0
        %614 = vmatmul.mubr.bf16.gmra.mxu0 %v410
        %v615 = vpop.f32.mrf.mxu0
        %v616 = vadd.f32 0.0, %v615
        %v617 = vpop.f32.mrf.mxu0
        %v618 = vpop.f32.mrf.mxu0
        %v619 = vadd.f32 0.0, %v618
        %v620 = vpop.f32.mrf.mxu0
        %621 = vmatprep.mubr.bf16.mxu0 0
        %622 = vmatmul.mubr.bf16.gmra.mxu0 %v411
        %v623 = vpop.f32.mrf.mxu0
        %v624 = vadd.f32 0.0, %v623
        %v625 = vpop.f32.mrf.mxu0
        %v626 = vpop.f32.mrf.mxu0
        %v627 = vadd.f32 0.0, %v626
        %v628 = vpop.f32.mrf.mxu0
        %629 = vmatprep.mubr.bf16.mxu0 0
        %630 = vmatmul.mubr.bf16.gmra.mxu0 %v412
        %v631 = vpop.f32.mrf.mxu0
        %v632 = vadd.f32 0.0, %v631
        %v633 = vpop.f32.mrf.mxu0
        %v634 = vpop.f32.mrf.mxu0
        %v635 = vadd.f32 0.0, %v634
        %v636 = vpop.f32.mrf.mxu0
        %637 = vdwg.mxu0
        %v638 = vadd.f32 %v253, %v512
        %v639 = vadd.f32 %v254, %v515
        %v640 = vadd.f32 %v255, %v520
        %v641 = vadd.f32 %v256, %v523
        %v642 = vadd.f32 %v257, %v528
        %v643 = vadd.f32 %v258, %v531
        %v644 = vadd.f32 %v259, %v536
        %v645 = vadd.f32 %v260, %v539
        %v646 = vadd.f32 %v261, %v544
        %v647 = vadd.f32 %v262, %v547
        %v648 = vadd.f32 %v263, %v552
        %v649 = vadd.f32 %v264, %v555
        %v650 = vadd.f32 %v265, %v560
        %v651 = vadd.f32 %v266, %v563
        %v652 = vadd.f32 %v267, %v568
        %v653 = vadd.f32 %v268, %v571
        %v654 = vadd.f32 %v269, %v576
        %v655 = vadd.f32 %v270, %v579
        %v656 = vadd.f32 %v271, %v584
        %v657 = vadd.f32 %v272, %v587
        %v658 = vadd.f32 %v273, %v592
        %v659 = vadd.f32 %v274, %v595
        %v660 = vadd.f32 %v275, %v600
        %v661 = vadd.f32 %v276, %v603
        %v662 = vadd.f32 %v277, %v608
        %v663 = vadd.f32 %v278, %v611
        %v664 = vadd.f32 %v279, %v616
        %v665 = vadd.f32 %v280, %v619
        %v666 = vadd.f32 %v281, %v624
        %v667 = vadd.f32 %v282, %v627
        %v668 = vadd.f32 %v283, %v632
        %v669 = vadd.f32 %v284, %v635
        %670 = vst [vmem:[#allocation2] sm:$0xff] %v638
        %671 = vst [vmem:[#allocation2 + $0x8] sm:$0xff] %v639
        %672 = vst [vmem:[#allocation2 + $0x10] sm:$0xff] %v640
        %673 = vst [vmem:[#allocation2 + $0x18] sm:$0xff] %v641
        %674 = vst [vmem:[#allocation2 + $0x20] sm:$0xff] %v642
        %675 = vst [vmem:[#allocation2 + $0x28] sm:$0xff] %v643
        %676 = vst [vmem:[#allocation2 + $0x30] sm:$0xff] %v644
        %677 = vst [vmem:[#allocation2 + $0x38] sm:$0xff] %v645
        %678 = vst [vmem:[#allocation2 + $0x40] sm:$0xff] %v646
        %679 = vst [vmem:[#allocation2 + $0x48] sm:$0xff] %v647
        %680 = vst [vmem:[#allocation2 + $0x50] sm:$0xff] %v648
        %681 = vst [vmem:[#allocation2 + $0x58] sm:$0xff] %v649
        %682 = vst [vmem:[#allocation2 + $0x60] sm:$0xff] %v650
        %683 = vst [vmem:[#allocation2 + $0x68] sm:$0xff] %v651
        %684 = vst [vmem:[#allocation2 + $0x70] sm:$0xff] %v652
        %685 = vst [vmem:[#allocation2 + $0x78] sm:$0xff] %v653
        %686 = vst [vmem:[#allocation2 + $0x80] sm:$0xff] %v654
        %687 = vst [vmem:[#allocation2 + $0x88] sm:$0xff] %v655
        %688 = vst [vmem:[#allocation2 + $0x90] sm:$0xff] %v656
        %689 = vst [vmem:[#allocation2 + $0x98] sm:$0xff] %v657
        %690 = vst [vmem:[#allocation2 + $0xa0] sm:$0xff] %v658
        %691 = vst [vmem:[#allocation2 + $0xa8] sm:$0xff] %v659
        %692 = vst [vmem:[#allocation2 + $0xb0] sm:$0xff] %v660
        %693 = vst [vmem:[#allocation2 + $0xb8] sm:$0xff] %v661
        %694 = vst [vmem:[#allocation2 + $0xc0] sm:$0xff] %v662
        %695 = vst [vmem:[#allocation2 + $0xc8] sm:$0xff] %v663
        %696 = vst [vmem:[#allocation2 + $0xd0] sm:$0xff] %v664
        %697 = vst [vmem:[#allocation2 + $0xd8] sm:$0xff] %v665
        %698 = vst [vmem:[#allocation2 + $0xe0] sm:$0xff] %v666
        %699 = vst [vmem:[#allocation2 + $0xe8] sm:$0xff] %v667
        %700 = vst [vmem:[#allocation2 + $0xf0] sm:$0xff] %v668
        %701 = vst [vmem:[#allocation2 + $0xf8] sm:$0xff] %v669
        // Predicated region
        $region41: #{tpu_custom_call.1} parent=27 // pred_check
          %p702 = pneg %p217
        $region42: #{tpu_custom_call.1} parent=27 // pred_check_branch
          %704 = sbr.rel (%p702) target = $region44
        $region43: #{tpu_custom_call.1} parent=27 // pred_region
          %v705 = vld [vmem:[#allocation2] sm:$0xff]
          %v706 = vld [vmem:[#allocation2 + $0x8] sm:$0xff]
          %v707 = vld [vmem:[#allocation2 + $0x10] sm:$0xff]
          %v708 = vld [vmem:[#allocation2 + $0x18] sm:$0xff]
          %v709 = vld [vmem:[#allocation2 + $0x20] sm:$0xff]
          %v710 = vld [vmem:[#allocation2 + $0x28] sm:$0xff]
          %v711 = vld [vmem:[#allocation2 + $0x30] sm:$0xff]
          %v712 = vld [vmem:[#allocation2 + $0x38] sm:$0xff]
          %v713 = vld [vmem:[#allocation2 + $0x40] sm:$0xff]
          %v714 = vld [vmem:[#allocation2 + $0x48] sm:$0xff]
          %v715 = vld [vmem:[#allocation2 + $0x50] sm:$0xff]
          %v716 = vld [vmem:[#allocation2 + $0x58] sm:$0xff]
          %v717 = vld [vmem:[#allocation2 + $0x60] sm:$0xff]
          %v718 = vld [vmem:[#allocation2 + $0x68] sm:$0xff]
          %v719 = vld [vmem:[#allocation2 + $0x70] sm:$0xff]
          %v720 = vld [vmem:[#allocation2 + $0x78] sm:$0xff]
          %v721 = vld [vmem:[#allocation2 + $0x80] sm:$0xff]
          %v722 = vld [vmem:[#allocation2 + $0x88] sm:$0xff]
          %v723 = vld [vmem:[#allocation2 + $0x90] sm:$0xff]
          %v724 = vld [vmem:[#allocation2 + $0x98] sm:$0xff]
          %v725 = vld [vmem:[#allocation2 + $0xa0] sm:$0xff]
          %v726 = vld [vmem:[#allocation2 + $0xa8] sm:$0xff]
          %v727 = vld [vmem:[#allocation2 + $0xb0] sm:$0xff]
          %v728 = vld [vmem:[#allocation2 + $0xb8] sm:$0xff]
          %v729 = vld [vmem:[#allocation2 + $0xc0] sm:$0xff]
          %v730 = vld [vmem:[#allocation2 + $0xc8] sm:$0xff]
          %v731 = vld [vmem:[#allocation2 + $0xd0] sm:$0xff]
          %v732 = vld [vmem:[#allocation2 + $0xd8] sm:$0xff]
          %v733 = vld [vmem:[#allocation2 + $0xe0] sm:$0xff]
          %v734 = vld [vmem:[#allocation2 + $0xe8] sm:$0xff]
          %v735 = vld [vmem:[#allocation2 + $0xf0] sm:$0xff]
          %v736 = vld [vmem:[#allocation2 + $0xf8] sm:$0xff]
          %v737 = vpack.c.bf16 %v706, %v705
          %v738 = vpack.c.bf16 %v708, %v707
          %v739 = vpack.c.bf16 %v710, %v709
          %v740 = vpack.c.bf16 %v712, %v711
          %v741 = vpack.c.bf16 %v714, %v713
          %v742 = vpack.c.bf16 %v716, %v715
          %v743 = vpack.c.bf16 %v718, %v717
          %v744 = vpack.c.bf16 %v720, %v719
          %v745 = vpack.c.bf16 %v722, %v721
          %v746 = vpack.c.bf16 %v724, %v723
          %v747 = vpack.c.bf16 %v726, %v725
          %v748 = vpack.c.bf16 %v728, %v727
          %v749 = vpack.c.bf16 %v730, %v729
          %v750 = vpack.c.bf16 %v732, %v731
          %v751 = vpack.c.bf16 %v734, %v733
          %v752 = vpack.c.bf16 %v736, %v735
          %v769 = vunpack.c.l.b16 %v737
          %v770 = vunpack.c.h.b16 %v737
          %v771 = vunpack.c.l.b16 %v738
          %v772 = vunpack.c.h.b16 %v738
          %v773 = vunpack.c.l.b16 %v739
          %v774 = vunpack.c.h.b16 %v739
          %v775 = vunpack.c.l.b16 %v740
          %v776 = vunpack.c.h.b16 %v740
          %v777 = vunpack.c.l.b16 %v741
          %v778 = vunpack.c.h.b16 %v741
          %v779 = vunpack.c.l.b16 %v742
          %v780 = vunpack.c.h.b16 %v742
          %v781 = vunpack.c.l.b16 %v743
          %v782 = vunpack.c.h.b16 %v743
          %v783 = vunpack.c.l.b16 %v744
          %v784 = vunpack.c.h.b16 %v744
          %v785 = vunpack.c.l.b16 %v745
          %v786 = vunpack.c.h.b16 %v745
          %v787 = vunpack.c.l.b16 %v746
          %v788 = vunpack.c.h.b16 %v746
          %v789 = vunpack.c.l.b16 %v747
          %v790 = vunpack.c.h.b16 %v747
          %v791 = vunpack.c.l.b16 %v748
          %v792 = vunpack.c.h.b16 %v748
          %v793 = vunpack.c.l.b16 %v749
          %v794 = vunpack.c.h.b16 %v749
          %v795 = vunpack.c.l.b16 %v750
          %v796 = vunpack.c.h.b16 %v750
          %v797 = vunpack.c.l.b16 %v751
          %v798 = vunpack.c.h.b16 %v751
          %v799 = vunpack.c.l.b16 %v752
          %v800 = vunpack.c.h.b16 %v752
          %v801 = vpack.c.b16 %v769, %v769
          %v802 = vpack.c.b16 %v770, %v770
          %v803 = vpack.c.b16 %v771, %v771
          %v804 = vpack.c.b16 %v772, %v772
          %v805 = vpack.c.b16 %v773, %v773
          %v806 = vpack.c.b16 %v774, %v774
          %v807 = vpack.c.b16 %v775, %v775
          %v808 = vpack.c.b16 %v776, %v776
          %v809 = vpack.c.b16 %v777, %v777
          %v810 = vpack.c.b16 %v778, %v778
          %v811 = vpack.c.b16 %v779, %v779
          %v812 = vpack.c.b16 %v780, %v780
          %v813 = vpack.c.b16 %v781, %v781
          %v814 = vpack.c.b16 %v782, %v782
          %v815 = vpack.c.b16 %v783, %v783
          %v816 = vpack.c.b16 %v784, %v784
          %v817 = vpack.c.b16 %v785, %v785
          %v818 = vpack.c.b16 %v786, %v786
          %v819 = vpack.c.b16 %v787, %v787
          %v820 = vpack.c.b16 %v788, %v788
          %v821 = vpack.c.b16 %v789, %v789
          %v822 = vpack.c.b16 %v790, %v790
          %v823 = vpack.c.b16 %v791, %v791
          %v824 = vpack.c.b16 %v792, %v792
          %v825 = vpack.c.b16 %v793, %v793
          %v826 = vpack.c.b16 %v794, %v794
          %v827 = vpack.c.b16 %v795, %v795
          %v828 = vpack.c.b16 %v796, %v796
          %v829 = vpack.c.b16 %v797, %v797
          %v830 = vpack.c.b16 %v798, %v798
          %v831 = vpack.c.b16 %v799, %v799
          %v832 = vpack.c.b16 %v800, %v800
          %865 = vst [vmem:[%s212] sm:$0xf] %v801
          %866 = vst [vmem:[%s212 + $0x4] sm:$0xf] %v802
          %867 = vst [vmem:[%s212 + $0x8] sm:$0xf] %v803
          %868 = vst [vmem:[%s212 + $0xc] sm:$0xf] %v804
          %869 = vst [vmem:[%s212 + $0x10] sm:$0xf] %v805
          %870 = vst [vmem:[%s212 + $0x14] sm:$0xf] %v806
          %871 = vst [vmem:[%s212 + $0x18] sm:$0xf] %v807
          %872 = vst [vmem:[%s212 + $0x1c] sm:$0xf] %v808
          %873 = vst [vmem:[%s212 + $0x20] sm:$0xf] %v809
          %874 = vst [vmem:[%s212 + $0x24] sm:$0xf] %v810
          %875 = vst [vmem:[%s212 + $0x28] sm:$0xf] %v811
          %876 = vst [vmem:[%s212 + $0x2c] sm:$0xf] %v812
          %877 = vst [vmem:[%s212 + $0x30] sm:$0xf] %v813
          %878 = vst [vmem:[%s212 + $0x34] sm:$0xf] %v814
          %879 = vst [vmem:[%s212 + $0x38] sm:$0xf] %v815
          %880 = vst [vmem:[%s212 + $0x3c] sm:$0xf] %v816
          %881 = vst [vmem:[%s212 + $0x40] sm:$0xf] %v817
          %882 = vst [vmem:[%s212 + $0x44] sm:$0xf] %v818
          %883 = vst [vmem:[%s212 + $0x48] sm:$0xf] %v819
          %884 = vst [vmem:[%s212 + $0x4c] sm:$0xf] %v820
          %885 = vst [vmem:[%s212 + $0x50] sm:$0xf] %v821
          %886 = vst [vmem:[%s212 + $0x54] sm:$0xf] %v822
          %887 = vst [vmem:[%s212 + $0x58] sm:$0xf] %v823
          %888 = vst [vmem:[%s212 + $0x5c] sm:$0xf] %v824
          %889 = vst [vmem:[%s212 + $0x60] sm:$0xf] %v825
          %890 = vst [vmem:[%s212 + $0x64] sm:$0xf] %v826
          %891 = vst [vmem:[%s212 + $0x68] sm:$0xf] %v827
          %892 = vst [vmem:[%s212 + $0x6c] sm:$0xf] %v828
          %893 = vst [vmem:[%s212 + $0x70] sm:$0xf] %v829
          %894 = vst [vmem:[%s212 + $0x74] sm:$0xf] %v830
          %895 = vst [vmem:[%s212 + $0x78] sm:$0xf] %v831
          %896 = vst [vmem:[%s212 + $0x7c] sm:$0xf] %v832
        $region44: #{tpu_custom_call.1} parent=27 // pred_fallthru
          _
        %s897 = sand.u32 %s105, 1
        %s898 = scalar_lea.sflag [#allocation5], %s897
        %s899 = sand.u32 %s105, 1
        %s900 = smul.addr %s899, 128
        %s901 = scalar_lea.vmem [#allocation8], %s900
        // Predicated region
        $region45: #{tpu_custom_call.1} parent=27 // pred_check
          %p902 = pneg %p115
        $region46: #{tpu_custom_call.1} parent=27 // pred_check_branch
          %904 = sbr.rel (%p902) target = $region48
        $region47: #{tpu_custom_call.1} parent=27 // pred_region
          %s905 = smul.u32 32, %s26
          %s907 = ssub.s32 2048, 2048
          %908 = vsyncadd %s898, %s907
          %s909 = smul.addr %s25, 32
          %s910 = sadd.s32 %s905, %s909
          %s911 = smul.addr %s910, 64
          %s912 = scalar_lea.hbm %s2, %s911
          %s913 = sshll.u32 %s901, 4
          %s914 = int_to_ptr.vmem [resolvable:$true] %s913
          %919 = dma.vmem_to_hbm [thread:$0]  %s914, 2048, %s912, %s898, 64, 64, 4
        $region48: #{tpu_custom_call.1} parent=27 // pred_fallthru
          _
      $region28: #{tpu_custom_call.1} parent=5 // pred_fallthru
        _
      %p920 = scmp.le.s32.totalorder 2, %s15
      // Predicated region
      $region49: #{tpu_custom_call.1} parent=5 // pred_check
        %p921 = pneg %p920
      $region50: #{tpu_custom_call.1} parent=5 // pred_check_branch
        %923 = sbr.rel (%p921) target = $region52
      $region51: #{tpu_custom_call.1} parent=5 // pred_region
        %s924 = ssub.s32 %s15, 2
        // Predicated region
        $region53: #{tpu_custom_call.1} parent=51 // pred_check
          %p925 = pneg %p121
        $region54: #{tpu_custom_call.1} parent=51 // pred_check_branch
          %927 = sbr.rel (%p925) target = $region56
        $region55: #{tpu_custom_call.1} parent=51 // pred_region
          %s928 = sand.u32 %s106, 1
          %s929 = scalar_lea.sflag [#allocation5], %s928
          %s930 = sand.u32 %s106, 1
          %s931 = smul.addr %s930, 128
          %s932 = scalar_lea.vmem [#allocation8], %s931
          %933 = dma.done %s929, 2048
        $region56: #{tpu_custom_call.1} parent=51 // pred_fallthru
          _
      $region52: #{tpu_custom_call.1} parent=5 // pred_fallthru
        _
    $region6: #{tpu_custom_call.1} parent=1 // loop_footer
      %s19 = sadd.s32 1, %s15
    $region7: #{tpu_custom_call.1} parent=1 // loop_footer_branch
      %14 = sbr.rel target = $region3
    $region8: #{tpu_custom_call.1} parent=1 // loop_exit
      _
    %934 = vsyncpa [#allocation4], 1
    %s935 = scalar_lea.sflag [#allocation4], 1
    %936 = vsyncpa %s935, 1
    %937 = vsyncpa [#allocation7], 1
    %938 = vsyncpa [#allocation5], 1
    %s939 = scalar_lea.sflag [#allocation5], 1
    %940 = vsyncpa %s939, 1

</llo_original>
